<compile_context>
chip_gen: v6e
topology: v6e:2x2x1
jax: 0.10.0
libtpu: 0.0.40
codegen_flags: <defaults>
</compile_context>

<pallas_src>
import jax
import jax.numpy as jnp
from jax.experimental import pallas as pl
from jax.experimental.pallas import tpu as pltpu


def prenorm_kernel(x_ref, g_ref, b_ref, w_ref, wb_ref, o_ref):
    # x_ref: (tm, D) tile of flattened (B*N) tokens.
    # gamma/beta/bias arrive already in f32 and W already in bf16, so the only
    # per-iteration cast is on the x tile itself (which changes every step).
    x = x_ref[...].astype(jnp.float32)

    # LayerNorm over the feature axis (PyTorch nn.LayerNorm: biased var, eps=1e-5).
    mean = jnp.mean(x, axis=-1, keepdims=True)
    xc = x - mean
    var = jnp.mean(xc * xc, axis=-1, keepdims=True)
    xn = xc * jax.lax.rsqrt(var + 1e-5)
    y = xn * g_ref[...] + b_ref[...]                      # f32 VPU math

    # fn = Linear(D, D_out): bf16 x bf16 -> f32 accumulate on the MXU.
    out = jnp.dot(y.astype(jnp.bfloat16), w_ref[...],
                  preferred_element_type=jnp.float32)
    o_ref[...] = (out + wb_ref[...]).astype(o_ref.dtype)


def _round_up(n, m):
    return ((n + m - 1) // m) * m


def _spec(shape, index_map, *, buffers=None):
    """BlockSpec, optionally single-/multi-buffered; falls back if the jax
    version predates pipeline_mode."""
    if buffers is not None:
        try:
            return pl.BlockSpec(shape, index_map,
                                pipeline_mode=pl.Buffered(buffers))
        except TypeError:
            pass
    return pl.BlockSpec(shape, index_map)


def prenorm(x, gamma, beta, w, wb, *, tm=512, tn=None):
    """x: (B, N, D) -> (B, N, D_out).  LayerNorm over D, then Linear(D, D_out).
    Output dtype matches x dtype (use bf16 activations for a mem-bound win)."""
    B, N, D = x.shape
    D_out = w.shape[-1]
    M = B * N

    # ---- row tile: multiple of 8 sublanes, >= 2 tiles whenever possible so
    # the 'parallel' axis can shard across v7x's two TensorCores.
    if M <= 8:
        tm = M                                   # full extent, single block
    else:
        tm = max(8, min(tm, _round_up(pl.cdiv(M, 2), 8)))
    n_i = pl.cdiv(M, tm)                         # tail block is masked by Pallas

    # ---- D_out tile: only tile very large fan-outs (keeps the f32 out tile +
    # W within VMEM on v7x); tn multiple of 128 for lane-dense stores.
    if tn is None:
        tn = D_out if D_out <= 2048 else 1024
    n_j = pl.cdiv(D_out, tn)

    # Flatten tokens -- pure view, no extra HBM pass (no pad, no tail slice).
    x2 = x.reshape(M, D)

    # Grid-invariant params pre-converted to their compute dtypes (hoists the
    # per-iteration casts out of the kernel; halves W's HBM/VMEM footprint).
    gamma_f = gamma.reshape(1, D).astype(jnp.float32)
    beta_f = beta.reshape(1, D).astype(jnp.float32)
    wb_f = wb.reshape(1, D_out).astype(jnp.float32)
    w_bf = w.astype(jnp.bfloat16)

    # ---- VMEM budget: double-buffered x/out tiles, W/params single-buffered
    # when grid-invariant, plus the in-kernel temporaries (f32 x copy, bf16 y,
    # f32 pre-cast out), with headroom, capped at 80% of physical VMEM.
    io_bytes = jnp.dtype(x.dtype).itemsize
    w_bufs = 1 if n_j == 1 else 2
    est = (2 * tm * D * io_bytes            # x tiles (double-buffered)
           + 2 * tm * tn * io_bytes         # out tiles (double-buffered)
           + w_bufs * D * tn * 2            # W bf16
           + 2 * D * 4 * 2                  # gamma + beta f32
           + 2 * tn * 4                     # linear bias f32
           + tm * D * (4 + 2)               # temporaries: x f32, y bf16
           + tm * tn * 4)                   # temporary: f32 matmul result
    try:
        phys_vmem = pltpu.get_tpu_info().vmem_capacity_bytes
    except Exception:                        # pragma: no cover - older jax
        phys_vmem = 64 << 20                 # conservative (v7x per-TC VMEM)
    cap = int(phys_vmem * 0.8)
    vmem_limit = min(max(int(1.2 * est) + (4 << 20), 16 << 20), cap)

    in_specs = [
        _spec((tm, D), lambda i, j: (i, 0)),                       # x (pipelined)
        _spec((1, D), lambda i, j: (0, 0), buffers=1),             # gamma
        _spec((1, D), lambda i, j: (0, 0), buffers=1),             # beta
        _spec((D, tn), lambda i, j: (0, j),
              buffers=1 if n_j == 1 else None),                    # W bf16
        _spec((1, tn), lambda i, j: (0, j),
              buffers=1 if n_j == 1 else None),                    # linear bias
    ]
    out_specs = pl.BlockSpec((tm, tn), lambda i, j: (i, j))

    out2 = pl.pallas_call(
        prenorm_kernel,
        out_shape=jax.ShapeDtypeStruct((M, D_out), x.dtype),
        grid_spec=pltpu.PrefetchScalarGridSpec(
            num_scalar_prefetch=0,
            grid=(n_i, n_j),                 # j inner -> x tile reused across j
            in_specs=in_specs,
            out_specs=out_specs,
        ),
        compiler_params=pltpu.CompilerParams(
            # row axis shards across TCs (v7x); keep j sequential so the x tile
            # is read from HBM exactly once per row tile.
            dimension_semantics=("parallel", "arbitrary"),
            vmem_limit_bytes=vmem_limit,
        ),
    )(x2, gamma_f, beta_f, w_bf, wb_f)

    return out2.reshape(B, N, D_out)


def prenorm_ref(x, gamma, beta, w, wb):
    """Pure-JAX reference (same bf16-MXU matmul contract as the kernel)."""
    xf = x.astype(jnp.float32)
    mean = jnp.mean(xf, axis=-1, keepdims=True)
    var = jnp.mean((xf - mean) ** 2, axis=-1, keepdims=True)
    xn = (xf - mean) * jax.lax.rsqrt(var + 1e-5)
    y = xn * gamma.reshape(1, 1, -1).astype(jnp.float32) + beta.reshape(1, 1, -1).astype(jnp.float32)
    out = jnp.dot(y.astype(jnp.bfloat16), w.astype(jnp.bfloat16),
                  preferred_element_type=jnp.float32)
    return (out + wb.reshape(1, 1, -1)).astype(x.dtype)


if __name__ == "__main__":
    # Small ViT-like shapes: B*N = 200 tokens, not divisible by the row tile
    # (tm -> 104, grid_i = 2): exercises the masked tail block and the >=2-tile
    # parallel row axis.  D = D_out = 128 keeps the demo small.
    B, N, D, D_out = 2, 100, 128, 128
    key = jax.random.PRNGKey(0)
    kx, kw, kb = jax.random.split(key, 3)

    x = jax.random.normal(kx, (B, N, D), dtype=jnp.float32)

    # LayerNorm params: PyTorch default init (ones / zeros)
    gamma = jnp.ones((D,), dtype=jnp.float32)
    beta = jnp.zeros((D,), dtype=jnp.float32)

    # fn = Linear(D, D_out): deterministic synthetic weights
    w = jax.random.normal(kw, (D, D_out), dtype=jnp.float32) * (1.0 / jnp.sqrt(D))
    wb = jax.random.normal(kb, (D_out,), dtype=jnp.float32) * 0.01

    out = prenorm(x, gamma, beta, w, wb)
    jax.block_until_ready(out)

    ref = prenorm_ref(x, gamma, beta, w, wb)
    assert out.shape == (B, N, D_out), out.shape
    assert jnp.allclose(out, ref, atol=1e-2, rtol=1e-2), "mismatch vs reference"

    # bf16 activation path (halves both dominant HBM streams on this
    # bandwidth-bound kernel); LayerNorm statistics still computed in f32.
    out_bf16 = prenorm(x.astype(jnp.bfloat16), gamma, beta, w, wb)
    jax.block_until_ready(out_bf16)
    assert out_bf16.dtype == jnp.bfloat16
    assert jnp.allclose(out_bf16.astype(jnp.float32), ref, atol=2e-1, rtol=5e-2)

    print("KERNEL_OK")
</pallas_src>

<mosaic_0001>
module attributes {stable_mosaic.version = 11 : i64} {
  func.func @prenorm_kernel(%arg0: i32, %arg1: i32, %arg2: memref<104x128xf32, #tpu.memory_space<vmem>>, %arg3: memref<1x128xf32, #tpu.memory_space<vmem>>, %arg4: memref<1x128xf32, #tpu.memory_space<vmem>>, %arg5: memref<128x128xbf16, #tpu.memory_space<vmem>>, %arg6: memref<1x128xf32, #tpu.memory_space<vmem>>, %arg7: memref<104x128xf32, #tpu.memory_space<vmem>>) attributes {dimension_semantics = [#tpu.dimension_semantics<parallel>, #tpu.dimension_semantics<arbitrary>], iteration_bounds = array<i64: 2, 1>, scalar_prefetch = 0 : i64, scratch_operands = 0 : i64, tpu.core_type = #tpu.core_type<tc>, window_params = [{transform_indices = @transform_0, window_bounds = array<i64: 104, 128>}, {pipeline_mode = #tpu.pipeline_mode<synchronous>, transform_indices = @transform_1, window_bounds = array<i64: 1, 128>}, {pipeline_mode = #tpu.pipeline_mode<synchronous>, transform_indices = @transform_2, window_bounds = array<i64: 1, 128>}, {pipeline_mode = #tpu.pipeline_mode<synchronous>, transform_indices = @transform_3, window_bounds = array<i64: 128, 128>}, {pipeline_mode = #tpu.pipeline_mode<synchronous>, transform_indices = @transform_4, window_bounds = array<i64: 1, 128>}, {transform_indices = @transform_5, window_bounds = array<i64: 104, 128>}]} {
    %c0 = arith.constant 0 : index
    %c0_0 = arith.constant 0 : index
    %0 = vector.load %arg2[%c0, %c0_0] : memref<104x128xf32, #tpu.memory_space<vmem>>, vector<104x128xf32>
    %cst = arith.constant dense<0.000000e+00> : vector<104xf32>
    %1 = vector.multi_reduction <add>, %0, %cst [1] : vector<104x128xf32> to vector<104xf32>
    %2 = vector.shape_cast %1 : vector<104xf32> to vector<104x1xf32>
    %cst_1 = arith.constant 1.280000e+02 : f32
    %3 = vector.broadcast %cst_1 : f32 to vector<104x1xf32>
    %4 = arith.divf %2, %3 : vector<104x1xf32>
    %5 = vector.broadcast %4 : vector<104x1xf32> to vector<104x128xf32>
    %6 = arith.subf %0, %5 : vector<104x128xf32>
    %7 = arith.mulf %6, %6 : vector<104x128xf32>
    %cst_2 = arith.constant dense<0.000000e+00> : vector<104xf32>
    %8 = vector.multi_reduction <add>, %7, %cst_2 [1] : vector<104x128xf32> to vector<104xf32>
    %9 = vector.shape_cast %8 : vector<104xf32> to vector<104x1xf32>
    %cst_3 = arith.constant 1.280000e+02 : f32
    %10 = vector.broadcast %cst_3 : f32 to vector<104x1xf32>
    %11 = arith.divf %9, %10 : vector<104x1xf32>
    %cst_4 = arith.constant 9.99999974E-6 : f32
    %12 = vector.broadcast %cst_4 : f32 to vector<104x1xf32>
    %13 = arith.addf %11, %12 : vector<104x1xf32>
    %14 = math.rsqrt %13 : vector<104x1xf32>
    %15 = vector.broadcast %14 : vector<104x1xf32> to vector<104x128xf32>
    %16 = arith.mulf %6, %15 : vector<104x128xf32>
    %c0_5 = arith.constant 0 : index
    %c0_6 = arith.constant 0 : index
    %17 = vector.load %arg3[%c0_5, %c0_6] : memref<1x128xf32, #tpu.memory_space<vmem>>, vector<1x128xf32>
    %18 = vector.broadcast %17 : vector<1x128xf32> to vector<104x128xf32>
    %19 = arith.mulf %16, %18 : vector<104x128xf32>
    %c0_7 = arith.constant 0 : index
    %c0_8 = arith.constant 0 : index
    %20 = vector.load %arg4[%c0_7, %c0_8] : memref<1x128xf32, #tpu.memory_space<vmem>>, vector<1x128xf32>
    %21 = vector.broadcast %20 : vector<1x128xf32> to vector<104x128xf32>
    %22 = arith.addf %19, %21 : vector<104x128xf32>
    %23 = arith.truncf %22 : vector<104x128xf32> to vector<104x128xbf16>
    %c0_9 = arith.constant 0 : index
    %c0_10 = arith.constant 0 : index
    %24 = vector.load %arg5[%c0_9, %c0_10] : memref<128x128xbf16, #tpu.memory_space<vmem>>, vector<128x128xbf16>
    %cst_11 = arith.constant dense<0.000000e+00> : vector<104x128xf32>
    %25 = tpu.matmul %23, %24, %cst_11 {dimension_numbers = #tpu.dot_dimension_numbers<[1], [0], [0], [1], [0, 0, 1, 1], [], []>} : vector<104x128xbf16>, vector<128x128xbf16>, vector<104x128xf32> -> vector<104x128xf32>
    %c0_12 = arith.constant 0 : index
    %c0_13 = arith.constant 0 : index
    %26 = vector.load %arg6[%c0_12, %c0_13] : memref<1x128xf32, #tpu.memory_space<vmem>>, vector<1x128xf32>
    %27 = vector.broadcast %26 : vector<1x128xf32> to vector<104x128xf32>
    %28 = arith.addf %25, %27 : vector<104x128xf32>
    %c0_14 = arith.constant 0 : index
    %c0_15 = arith.constant 0 : index
    %29 = vector.load %arg7[%c0_14, %c0_15] : memref<104x128xf32, #tpu.memory_space<vmem>>, vector<104x128xf32>
    tpu.vector_store %arg7[%c0_14, %c0_15], %28 {strides = array<i32>} : memref<104x128xf32, #tpu.memory_space<vmem>>, vector<104x128xf32>,
    return
  }
  func.func @transform_0(%arg0: i32, %arg1: i32) -> (i32, i32) {
    %c0_i32 = arith.constant 0 : i32
    %c0_i32_0 = arith.constant 0 : i32
    return %arg0, %c0_i32 : i32, i32
  }
  func.func @transform_1(%arg0: i32, %arg1: i32) -> (i32, i32) {
    %c0_i32 = arith.constant 0 : i32
    %c0_i32_0 = arith.constant 0 : i32
    %c0_i32_1 = arith.constant 0 : i32
    return %c0_i32, %c0_i32_0 : i32, i32
  }
  func.func @transform_2(%arg0: i32, %arg1: i32) -> (i32, i32) {
    %c0_i32 = arith.constant 0 : i32
    %c0_i32_0 = arith.constant 0 : i32
    %c0_i32_1 = arith.constant 0 : i32
    return %c0_i32, %c0_i32_0 : i32, i32
  }
  func.func @transform_3(%arg0: i32, %arg1: i32) -> (i32, i32) {
    %c0_i32 = arith.constant 0 : i32
    %c0_i32_0 = arith.constant 0 : i32
    return %c0_i32, %arg1 : i32, i32
  }
  func.func @transform_4(%arg0: i32, %arg1: i32) -> (i32, i32) {
    %c0_i32 = arith.constant 0 : i32
    %c0_i32_0 = arith.constant 0 : i32
    return %c0_i32, %arg1 : i32, i32
  }
  func.func @transform_5(%arg0: i32, %arg1: i32) -> (i32, i32) {
    %c0_i32 = arith.constant 0 : i32
    return %arg0, %arg1 : i32, i32
  }
}

</mosaic_0001>

<llo_original>
// kernel: tpu_custom_call.1
$region0: #{tpu_custom_call.1}
  #allocation0 [shape = 'u32[]', space=smem, size = 0x4, offset = 0x4, fixed_abs, tag = 'smem constant byte address 0x4 - core index']
  #allocation1 [shape = 'u32[144,128]{1,0:T(1,128)}', space=vmem, size = 0x12000, scoped, tag = 'internal scratch']
  %s0 = inlined_call_operand.hbm [shape: f32[200,128], index: 0, kind: input, shape index: {}]
  %s1 = inlined_call_operand.vmem [shape: f32[1,128], index: 1, kind: input, shape index: {}]
  %s2 = inlined_call_operand.vmem [shape: f32[1,128], index: 2, kind: input, shape index: {}]
  %s3 = inlined_call_operand.hbm [shape: bf16[128,128], index: 3, kind: input, shape index: {}]
  %s4 = inlined_call_operand.vmem [shape: f32[1,128], index: 4, kind: input, shape index: {}]
  %s5 = inlined_call_operand.hbm [shape: f32[200,128], index: 5, kind: output, shape index: {}]
  %s6 = sld [smem:[#allocation0]]
  $region61: #{tpu_custom_call.1} parent=0
    _
  %s8 = ssub.s32 1, %s6
  %s9 = scalar_select 0, %s8, %s6
  $region1: #{tpu_custom_call.1} parent=0
    #allocation2 [shape = 'u8[106496]{0}', space=vmem, size = 0x1a000, scoped, tag = 'input window, operand 0']
    #allocation3 [shape = 's32[2]{0}', space=sflag, size = 0x8, scoped, tag = 'scoped memory for tpu_custom_call.1']
    #allocation4 [shape = 's32[2]{0}', space=sflag, size = 0x8, scoped, tag = 'scoped memory for tpu_custom_call.1']
    #allocation5 [shape = 'u8[32768]{0}', space=vmem, size = 0x8000, scoped, tag = 'input window, operand 3, single buffered']
    #allocation6 [shape = 's32[1]{0}', space=sflag, size = 0x4, scoped, tag = 'scoped memory for tpu_custom_call.1']
    #allocation7 [shape = 'u8[106496]{0}', space=vmem, size = 0x1a000, scoped, tag = 'output window, operand 0']
    %10 = vsyncpa [#allocation3], 0
    %s11 = scalar_lea.sflag [#allocation3], 1
    %12 = vsyncpa %s11, 0
    %13 = vsyncpa [#allocation6], 0
    %14 = vsyncpa [#allocation4], 0
    %s15 = scalar_lea.sflag [#allocation4], 1
    %16 = vsyncpa %s15, 0
    loop: start=0, step=1, limit=4
    $region2: #{tpu_custom_call.1} parent=1 // loop_pre_header
      _
    $region3: #{tpu_custom_call.1} parent=1 // loop_header
      %s18 = sphi 0, %s22
      %p19 = scmp.ge.s32.totalorder %s18, 4
      %s25 = sphi 0, %s37
      %s26 = sphi 0, %s33
      %s27 = sphi 0, %s25
      %s28 = sphi 0, %s26
      %s29 = sphi 0, %s27
      %s30 = sphi 0, %s28
      %s40 = sphi 0, %s42
      %s43 = sphi 0, %s40
      %s44 = sphi 0, %s43
      %s60 = sphi 0, %s44
      %s64 = sphi 0, %s64
      %s66 = sphi 0, %s64
      %s67 = sphi 0, %s66
      %s81 = sphi 0, %s67
      %s85 = sphi 0, %s85
      %s87 = sphi 0, %s85
      %s88 = sphi 0, %s87
      %s102 = sphi 0, %s88
      %s108 = sphi 0, %s110
      %s111 = sphi 0, %s108
      %s112 = sphi 0, %s111
      %s128 = sphi 0, %s112
      %s134 = sphi 0, %s136
      %s137 = sphi 0, %s134
      %s138 = sphi 0, %s137
      %s154 = sphi 0, %s138
      %s162 = sphi 0, %s164
      %s165 = sphi 0, %s162
      %s166 = sphi 0, %s165
      %s182 = sphi 0, %s166
    $region4: #{tpu_custom_call.1} parent=1 // loop_header_branch
      %21 = sbr.rel (%p19) target = $region8
    $region5: #{tpu_custom_call.1} parent=1 // loop_body
      %s23 = ssub.s32 %s18, 1
      %s24 = ssub.s32 %s18, 2
      %s31 = sadd.s32 1, %s26
      %p32 = scmp.ge.s32.totalorder %s31, 1
      %s33 = scalar_select %p32, 0, %s31
      %s34 = sadd.s32 1, %s25
      %s35 = scalar_select %p32, %s34, %s25
      %p36 = scmp.ge.s32.totalorder %s35, 2
      %s37 = scalar_select %p36, 0, %s35
      %s38 = ssub.s32 %s25, %s37
      %p39 = scmp.eq.s32.totalorder %s38, 0
      %s41 = sadd.s32 %s40, 1
      %s42 = scalar_select %p39, %s40, %s41
      %p45 = pneg %p39
      %p46 = scmp.eq.s32.totalorder %s18, 1
      %p47 = por %p45, %p46
      %p48 = scmp.ne.s32.totalorder %s40, %s43
      %p49 = scmp.eq.s32.totalorder %s18, 0
      %p50 = por %p48, %p49
      %p51 = scmp.ne.s32.totalorder %s40, %s43
      %p52 = scmp.eq.s32.totalorder %s23, 1
      %p53 = por %p51, %p52
      %p54 = scmp.ne.s32.totalorder %s43, %s44
      %p55 = scmp.eq.s32.totalorder %s23, 0
      %p56 = por %p54, %p55
      %p57 = scmp.ne.s32.totalorder %s43, %s44
      %p58 = scmp.eq.s32.totalorder %s24, 1
      %p59 = por %p57, %p58
      %p61 = scmp.ne.s32.totalorder %s44, %s60
      %p62 = scmp.eq.s32.totalorder %s24, 0
      %p63 = por %p61, %p62
      %s65 = sadd.s32 %s64, 1
      %p68 = scmp.eq.s32.totalorder %s18, 1
      %p69 = scmp.ne.s32.totalorder %s64, %s66
      %p70 = scmp.eq.s32.totalorder %s18, 0
      %p71 = por %p69, %p70
      %p72 = scmp.ne.s32.totalorder %s64, %s66
      %p73 = scmp.eq.s32.totalorder %s23, 1
      %p74 = por %p72, %p73
      %p75 = scmp.ne.s32.totalorder %s66, %s67
      %p76 = scmp.eq.s32.totalorder %s23, 0
      %p77 = por %p75, %p76
      %p78 = scmp.ne.s32.totalorder %s66, %s67
      %p79 = scmp.eq.s32.totalorder %s24, 1
      %p80 = por %p78, %p79
      %p82 = scmp.ne.s32.totalorder %s67, %s81
      %p83 = scmp.eq.s32.totalorder %s24, 0
      %p84 = por %p82, %p83
      %s86 = sadd.s32 %s85, 1
      %p89 = scmp.eq.s32.totalorder %s18, 1
      %p90 = scmp.ne.s32.totalorder %s85, %s87
      %p91 = scmp.eq.s32.totalorder %s18, 0
      %p92 = por %p90, %p91
      %p93 = scmp.ne.s32.totalorder %s85, %s87
      %p94 = scmp.eq.s32.totalorder %s23, 1
      %p95 = por %p93, %p94
      %p96 = scmp.ne.s32.totalorder %s87, %s88
      %p97 = scmp.eq.s32.totalorder %s23, 0
      %p98 = por %p96, %p97
      %p99 = scmp.ne.s32.totalorder %s87, %s88
      %p100 = scmp.eq.s32.totalorder %s24, 1
      %p101 = por %p99, %p100
      %p103 = scmp.ne.s32.totalorder %s88, %s102
      %p104 = scmp.eq.s32.totalorder %s24, 0
      %p105 = por %p103, %p104
      %s106 = ssub.s32 %s26, %s33
      %p107 = scmp.eq.s32.totalorder %s106, 0
      %s109 = sadd.s32 %s108, 1
      %s110 = scalar_select %p107, %s108, %s109
      %p113 = pneg %p107
      %p114 = scmp.eq.s32.totalorder %s18, 1
      %p115 = por %p113, %p114
      %p116 = scmp.ne.s32.totalorder %s108, %s111
      %p117 = scmp.eq.s32.totalorder %s18, 0
      %p118 = por %p116, %p117
      %p119 = scmp.ne.s32.totalorder %s108, %s111
      %p120 = scmp.eq.s32.totalorder %s23, 1
      %p121 = por %p119, %p120
      %p122 = scmp.ne.s32.totalorder %s111, %s112
      %p123 = scmp.eq.s32.totalorder %s23, 0
      %p124 = por %p122, %p123
      %p125 = scmp.ne.s32.totalorder %s111, %s112
      %p126 = scmp.eq.s32.totalorder %s24, 1
      %p127 = por %p125, %p126
      %p129 = scmp.ne.s32.totalorder %s112, %s128
      %p130 = scmp.eq.s32.totalorder %s24, 0
      %p131 = por %p129, %p130
      %s132 = ssub.s32 %s26, %s33
      %p133 = scmp.eq.s32.totalorder %s132, 0
      %s135 = sadd.s32 %s134, 1
      %s136 = scalar_select %p133, %s134, %s135
      %p139 = pneg %p133
      %p140 = scmp.eq.s32.totalorder %s18, 1
      %p141 = por %p139, %p140
      %p142 = scmp.ne.s32.totalorder %s134, %s137
      %p143 = scmp.eq.s32.totalorder %s18, 0
      %p144 = por %p142, %p143
      %p145 = scmp.ne.s32.totalorder %s134, %s137
      %p146 = scmp.eq.s32.totalorder %s23, 1
      %p147 = por %p145, %p146
      %p148 = scmp.ne.s32.totalorder %s137, %s138
      %p149 = scmp.eq.s32.totalorder %s23, 0
      %p150 = por %p148, %p149
      %p151 = scmp.ne.s32.totalorder %s137, %s138
      %p152 = scmp.eq.s32.totalorder %s24, 1
      %p153 = por %p151, %p152
      %p155 = scmp.ne.s32.totalorder %s138, %s154
      %p156 = scmp.eq.s32.totalorder %s24, 0
      %p157 = por %p155, %p156
      %s158 = ssub.s32 %s25, %s37
      %s159 = ssub.s32 %s26, %s33
      %s160 = sor.u32 %s158, %s159
      %p161 = scmp.eq.s32.totalorder %s160, 0
      %s163 = sadd.s32 %s162, 1
      %s164 = scalar_select %p161, %s162, %s163
      %p167 = pneg %p161
      %p168 = scmp.eq.s32.totalorder %s18, 1
      %p169 = por %p167, %p168
      %p170 = scmp.ne.s32.totalorder %s162, %s165
      %p171 = scmp.eq.s32.totalorder %s18, 0
      %p172 = por %p170, %p171
      %p173 = scmp.ne.s32.totalorder %s162, %s165
      %p174 = scmp.eq.s32.totalorder %s23, 1
      %p175 = por %p173, %p174
      %p176 = scmp.ne.s32.totalorder %s165, %s166
      %p177 = scmp.eq.s32.totalorder %s23, 0
      %p178 = por %p176, %p177
      %p179 = scmp.ne.s32.totalorder %s165, %s166
      %p180 = scmp.eq.s32.totalorder %s24, 1
      %p181 = por %p179, %p180
      %p183 = scmp.ne.s32.totalorder %s166, %s182
      %p184 = scmp.eq.s32.totalorder %s24, 0
      %p185 = por %p183, %p184
      %p186 = scmp.le.s32.totalorder 1, %s18
      %p187 = scmp.lt.s32.totalorder %s18, 3
      %p188 = pnand %p186, %p187
      %p189 = pneg %p188
      // Predicated region
      $region9: #{tpu_custom_call.1} parent=5 // pred_check
        _
      $region10: #{tpu_custom_call.1} parent=5 // pred_check_branch
        %191 = sbr.rel (%p188) target = $region12
      $region11: #{tpu_custom_call.1} parent=5 // pred_region
        %s192 = ssub.s32 %s18, 1
        // Predicated region
        $region13: #{tpu_custom_call.1} parent=11 // pred_check
          %p193 = pneg %p77
        $region14: #{tpu_custom_call.1} parent=11 // pred_check_branch
          %195 = sbr.rel (%p193) target = $region16
        $region15: #{tpu_custom_call.1} parent=11 // pred_region
          _
        $region16: #{tpu_custom_call.1} parent=11 // pred_fallthru
          _
        // Predicated region
        $region17: #{tpu_custom_call.1} parent=11 // pred_check
          %p196 = pneg %p98
        $region18: #{tpu_custom_call.1} parent=11 // pred_check_branch
          %198 = sbr.rel (%p196) target = $region20
        $region19: #{tpu_custom_call.1} parent=11 // pred_region
          _
        $region20: #{tpu_custom_call.1} parent=11 // pred_fallthru
          _
        // Predicated region
        $region21: #{tpu_custom_call.1} parent=11 // pred_check
          %p199 = pneg %p124
        $region22: #{tpu_custom_call.1} parent=11 // pred_check_branch
          %201 = sbr.rel (%p199) target = $region24
        $region23: #{tpu_custom_call.1} parent=11 // pred_region
          %s203 = ssub.s32 1024, 1024
          %204 = vsyncadd [#allocation6], %s203
          %s205 = smul.addr %s28, 64
          %s206 = scalar_lea.hbm %s3, %s205
          %s207 = sshll.u32 [#allocation5], 4
          %s208 = int_to_ptr.vmem [resolvable:$true] %s207
          %213 = dma.hbm_to_vmem [thread:$0]  %s206, 1024, %s208, [#allocation6], 64, 64, 4
        $region24: #{tpu_custom_call.1} parent=11 // pred_fallthru
          _
        // Predicated region
        $region25: #{tpu_custom_call.1} parent=11 // pred_check
          %p214 = pneg %p150
        $region26: #{tpu_custom_call.1} parent=11 // pred_check_branch
          %216 = sbr.rel (%p214) target = $region28
        $region27: #{tpu_custom_call.1} parent=11 // pred_region
          %p217 = scmp.lt.s32.totalorder %s28, 0
          %s218 = scalar_select %p217, %s28, 0
          %s219 = scalar_lea.vmem %s4, %s218
        $region28: #{tpu_custom_call.1} parent=11 // pred_fallthru
          _
      $region12: #{tpu_custom_call.1} parent=5 // pred_fallthru
        _
      %p220 = scmp.lt.s32.totalorder %s18, 2
      // Predicated region
      $region29: #{tpu_custom_call.1} parent=5 // pred_check
        %p221 = pneg %p220
      $region30: #{tpu_custom_call.1} parent=5 // pred_check_branch
        %223 = sbr.rel (%p221) target = $region32
      $region31: #{tpu_custom_call.1} parent=5 // pred_region
        // Predicated region
        $region33: #{tpu_custom_call.1} parent=31 // pred_check
          %p224 = pneg %p50
        $region34: #{tpu_custom_call.1} parent=31 // pred_check_branch
          %226 = sbr.rel (%p224) target = $region36
        $region35: #{tpu_custom_call.1} parent=31 // pred_region
          %s227 = sand.u32 %s40, 1
          %s228 = scalar_lea.sflag [#allocation3], %s227
          %s229 = sand.u32 %s40, 1
          %s230 = smul.addr %s229, 104
          %s231 = scalar_lea.vmem [#allocation2], %s230
          %s232 = smul.u32 13, %s25
          %s233 = ssub.s32 25, %s232
          %p234 = scmp.lt.s32.totalorder %s233, 13
          %s235 = scalar_select %p234, %s233, 13
          %s236 = smul.u32 128, %s235
          %s238 = ssub.s32 1664, %s236
          %239 = vsyncadd %s228, %s238
          %p240 = scmp.ne.s32.totalorder 0, %s236
          %s241 = smul.addr %s232, 128
          %s242 = scalar_lea.hbm %s0, %s241
          %s243 = smul.u32 8, %s235
          %s244 = sshll.u32 %s231, 4
          %s245 = int_to_ptr.vmem [resolvable:$true] %s244
          %s246 = sshll.u32 %s243, 4
          %250 = dma.hbm_to_vmem [thread:$0]  (%p240), %s242, %s246, %s245, %s228, 128, 128, 8
        $region36: #{tpu_custom_call.1} parent=31 // pred_fallthru
          _
      $region32: #{tpu_custom_call.1} parent=5 // pred_fallthru
        _
      %p251 = scmp.le.s32.totalorder 1, %s18
      %p252 = scmp.lt.s32.totalorder %s18, 3
      %p253 = pnand %p251, %p252
      %p254 = pneg %p253
      // Predicated region
      $region37: #{tpu_custom_call.1} parent=5 // pred_check
        _
      $region38: #{tpu_custom_call.1} parent=5 // pred_check_branch
        %256 = sbr.rel (%p253) target = $region40
      $region39: #{tpu_custom_call.1} parent=5 // pred_region
        %s257 = ssub.s32 %s18, 1
        %s258 = sand.u32 %s43, 1
        %s259 = scalar_lea.sflag [#allocation3], %s258
        %s260 = sand.u32 %s43, 1
        %s261 = smul.addr %s260, 104
        %s262 = scalar_lea.vmem [#allocation2], %s261
        // Predicated region
        $region41: #{tpu_custom_call.1} parent=39 // pred_check
          %p263 = pneg %p56
        $region42: #{tpu_custom_call.1} parent=39 // pred_check_branch
          %265 = sbr.rel (%p263) target = $region44
        $region43: #{tpu_custom_call.1} parent=39 // pred_region
          %266 = dma.done %s259, 1664
        $region44: #{tpu_custom_call.1} parent=39 // pred_fallthru
          _
        // Predicated region
        $region45: #{tpu_custom_call.1} parent=39 // pred_check
          %p267 = pneg %p124
        $region46: #{tpu_custom_call.1} parent=39 // pred_check_branch
          %269 = sbr.rel (%p267) target = $region48
        $region47: #{tpu_custom_call.1} parent=39 // pred_region
          %270 = dma.done [#allocation6], 1024
        $region48: #{tpu_custom_call.1} parent=39 // pred_fallthru
          _
        %s271 = sand.u32 %s43, 1
        %s272 = scalar_lea.sflag [#allocation3], %s271
        %s273 = sand.u32 %s43, 1
        %s274 = smul.addr %s273, 104
        %s275 = scalar_lea.vmem [#allocation2], %s274
        %p276 = pneg %p56
        %p277 = pneg %p53
        %p278 = pneg %p77
        %p279 = pneg %p74
        %p280 = pneg %p98
        %p281 = pneg %p95
        %p282 = pneg %p124
        %p283 = pneg %p121
        %p284 = scmp.lt.s32.totalorder %s28, 0
        %s285 = scalar_select %p284, %s28, 0
        %s286 = scalar_lea.vmem %s4, %s285
        %p287 = pneg %p150
        %p288 = pneg %p147
        %p289 = pneg %p178
        %p290 = pneg %p175
        %s291 = sand.u32 %s165, 1
        %s292 = scalar_lea.sflag [#allocation4], %s291
        %s293 = sand.u32 %s165, 1
        %s294 = smul.addr %s293, 104
        %s295 = scalar_lea.vmem [#allocation7], %s294
        %s296 = smul.u32 13, %s27
        %s297 = ssub.s32 25, %s296
        %p298 = scmp.lt.s32.totalorder %s297, 13
        %s299 = scalar_select %p298, %s297, 13
        %s300 = smul.u32 128, %s299
        %p301 = scmp.lt.s32.totalorder %s28, 0
        %s302 = scalar_select %p301, %s28, 0
        %s303 = scalar_lea.vmem %s4, %s302
        %s304 = smul.u32 13, %s27
        %s305 = ssub.s32 25, %s304
        %p306 = scmp.lt.s32.totalorder %s305, 13
        %s307 = scalar_select %p306, %s305, 13
        %s308 = smul.u32 128, %s307
        %v310 = vld [vmem:[%s262] sm:$0xff]
        %v311 = vld [vmem:[%s262 + $0x8] sm:$0xff]
        %v312 = vld [vmem:[%s262 + $0x10] sm:$0xff]
        %v313 = vld [vmem:[%s262 + $0x18] sm:$0xff]
        %v314 = vld [vmem:[%s262 + $0x20] sm:$0xff]
        %v315 = vld [vmem:[%s262 + $0x28] sm:$0xff]
        %v316 = vld [vmem:[%s262 + $0x30] sm:$0xff]
        %v317 = vld [vmem:[%s262 + $0x38] sm:$0xff]
        %v318 = vld [vmem:[%s262 + $0x40] sm:$0xff]
        %v319 = vld [vmem:[%s262 + $0x48] sm:$0xff]
        %v320 = vld [vmem:[%s262 + $0x50] sm:$0xff]
        %v321 = vld [vmem:[%s262 + $0x58] sm:$0xff]
        %v322 = vld [vmem:[%s262 + $0x60] sm:$0xff]
        %323 = vadd.xlane.f32.xlu0 %v310
        %v324 = vpop.xlane.xlu0 %323
        %325 = vadd.xlane.f32.xlu0 %v311
        %v326 = vpop.xlane.xlu0 %325
        %327 = vadd.xlane.f32.xlu0 %v312
        %v328 = vpop.xlane.xlu0 %327
        %329 = vadd.xlane.f32.xlu0 %v313
        %v330 = vpop.xlane.xlu0 %329
        %331 = vadd.xlane.f32.xlu0 %v314
        %v332 = vpop.xlane.xlu0 %331
        %333 = vadd.xlane.f32.xlu0 %v315
        %v334 = vpop.xlane.xlu0 %333
        %335 = vadd.xlane.f32.xlu0 %v316
        %v336 = vpop.xlane.xlu0 %335
        %337 = vadd.xlane.f32.xlu0 %v317
        %v338 = vpop.xlane.xlu0 %337
        %339 = vadd.xlane.f32.xlu0 %v318
        %v340 = vpop.xlane.xlu0 %339
        %341 = vadd.xlane.f32.xlu0 %v319
        %v342 = vpop.xlane.xlu0 %341
        %343 = vadd.xlane.f32.xlu0 %v320
        %v344 = vpop.xlane.xlu0 %343
        %345 = vadd.xlane.f32.xlu0 %v321
        %v346 = vpop.xlane.xlu0 %345
        %347 = vadd.xlane.f32.xlu0 %v322
        %v348 = vpop.xlane.xlu0 %347
        %v349 = vrcp.pop 128.0
        %v350 = vmul.f32 %v324, %v349
        %v351 = vmul.f32 %v326, %v349
        %v352 = vmul.f32 %v328, %v349
        %v353 = vmul.f32 %v330, %v349
        %v354 = vmul.f32 %v332, %v349
        %v355 = vmul.f32 %v334, %v349
        %v356 = vmul.f32 %v336, %v349
        %v357 = vmul.f32 %v338, %v349
        %v358 = vmul.f32 %v340, %v349
        %v359 = vmul.f32 %v342, %v349
        %v360 = vmul.f32 %v344, %v349
        %v361 = vmul.f32 %v346, %v349
        %v362 = vmul.f32 %v348, %v349
        %v363 = vsub.f32 %v310, %v350
        %v364 = vsub.f32 %v311, %v351
        %v365 = vsub.f32 %v312, %v352
        %v366 = vsub.f32 %v313, %v353
        %v367 = vsub.f32 %v314, %v354
        %v368 = vsub.f32 %v315, %v355
        %v369 = vsub.f32 %v316, %v356
        %v370 = vsub.f32 %v317, %v357
        %v371 = vsub.f32 %v318, %v358
        %v372 = vsub.f32 %v319, %v359
        %v373 = vsub.f32 %v320, %v360
        %v374 = vsub.f32 %v321, %v361
        %v375 = vsub.f32 %v322, %v362
        %v376 = vmul.f32 %v363, %v363
        %v377 = vmul.f32 %v364, %v364
        %v378 = vmul.f32 %v365, %v365
        %v379 = vmul.f32 %v366, %v366
        %v380 = vmul.f32 %v367, %v367
        %v381 = vmul.f32 %v368, %v368
        %v382 = vmul.f32 %v369, %v369
        %v383 = vmul.f32 %v370, %v370
        %v384 = vmul.f32 %v371, %v371
        %v385 = vmul.f32 %v372, %v372
        %v386 = vmul.f32 %v373, %v373
        %v387 = vmul.f32 %v374, %v374
        %v388 = vmul.f32 %v375, %v375
        %389 = vadd.xlane.f32.xlu0 %v376
        %v390 = vpop.xlane.xlu0 %389
        %391 = vadd.xlane.f32.xlu0 %v377
        %v392 = vpop.xlane.xlu0 %391
        %393 = vadd.xlane.f32.xlu0 %v378
        %v394 = vpop.xlane.xlu0 %393
        %395 = vadd.xlane.f32.xlu0 %v379
        %v396 = vpop.xlane.xlu0 %395
        %397 = vadd.xlane.f32.xlu0 %v380
        %v398 = vpop.xlane.xlu0 %397
        %399 = vadd.xlane.f32.xlu0 %v381
        %v400 = vpop.xlane.xlu0 %399
        %401 = vadd.xlane.f32.xlu0 %v382
        %v402 = vpop.xlane.xlu0 %401
        %403 = vadd.xlane.f32.xlu0 %v383
        %v404 = vpop.xlane.xlu0 %403
        %405 = vadd.xlane.f32.xlu0 %v384
        %v406 = vpop.xlane.xlu0 %405
        %407 = vadd.xlane.f32.xlu0 %v385
        %v408 = vpop.xlane.xlu0 %407
        %409 = vadd.xlane.f32.xlu0 %v386
        %v410 = vpop.xlane.xlu0 %409
        %411 = vadd.xlane.f32.xlu0 %v387
        %v412 = vpop.xlane.xlu0 %411
        %413 = vadd.xlane.f32.xlu0 %v388
        %v414 = vpop.xlane.xlu0 %413
        %v415 = vmul.f32 %v390, %v349
        %v416 = vmul.f32 %v392, %v349
        %v417 = vmul.f32 %v394, %v349
        %v418 = vmul.f32 %v396, %v349
        %v419 = vmul.f32 %v398, %v349
        %v420 = vmul.f32 %v400, %v349
        %v421 = vmul.f32 %v402, %v349
        %v422 = vmul.f32 %v404, %v349
        %v423 = vmul.f32 %v406, %v349
        %v424 = vmul.f32 %v408, %v349
        %v425 = vmul.f32 %v410, %v349
        %v426 = vmul.f32 %v412, %v349
        %v427 = vmul.f32 %v414, %v349
        %v428 = vadd.f32 %v415, 1e-05
        %v429 = vadd.f32 %v416, 1e-05
        %v430 = vadd.f32 %v417, 1e-05
        %v431 = vadd.f32 %v418, 1e-05
        %v432 = vadd.f32 %v419, 1e-05
        %v433 = vadd.f32 %v420, 1e-05
        %v434 = vadd.f32 %v421, 1e-05
        %v435 = vadd.f32 %v422, 1e-05
        %v436 = vadd.f32 %v423, 1e-05
        %v437 = vadd.f32 %v424, 1e-05
        %v438 = vadd.f32 %v425, 1e-05
        %v439 = vadd.f32 %v426, 1e-05
        %v440 = vadd.f32 %v427, 1e-05
        %v441 = vrsqrt.pop %v428
        %v442 = vrsqrt.pop %v429
        %v443 = vrsqrt.pop %v430
        %v444 = vrsqrt.pop %v431
        %v445 = vrsqrt.pop %v432
        %v446 = vrsqrt.pop %v433
        %v447 = vrsqrt.pop %v434
        %v448 = vrsqrt.pop %v435
        %v449 = vrsqrt.pop %v436
        %v450 = vrsqrt.pop %v437
        %v451 = vrsqrt.pop %v438
        %v452 = vrsqrt.pop %v439
        %v453 = vrsqrt.pop %v440
        %v454 = vmul.f32 %v363, %v441
        %v455 = vmul.f32 %v364, %v442
        %v456 = vmul.f32 %v365, %v443
        %v457 = vmul.f32 %v366, %v444
        %v458 = vmul.f32 %v367, %v445
        %v459 = vmul.f32 %v368, %v446
        %v460 = vmul.f32 %v369, %v447
        %v461 = vmul.f32 %v370, %v448
        %v462 = vmul.f32 %v371, %v449
        %v463 = vmul.f32 %v372, %v450
        %v464 = vmul.f32 %v373, %v451
        %v465 = vmul.f32 %v374, %v452
        %v466 = vmul.f32 %v375, %v453
        %v467 = vld [vmem:[%s1] sm:$0x1]
        %v469 = vlaneseq
        %v470 = vshrl.u32 %v469, 7
        %v471 = vsub.s32 0, %v470
        %v472 = vrot.slane %v467, %v471
        %v474 = vmul.f32 %v454, %v472
        %v475 = vmul.f32 %v455, %v472
        %v476 = vmul.f32 %v456, %v472
        %v477 = vmul.f32 %v457, %v472
        %v478 = vmul.f32 %v458, %v472
        %v479 = vmul.f32 %v459, %v472
        %v480 = vmul.f32 %v460, %v472
        %v481 = vmul.f32 %v461, %v472
        %v482 = vmul.f32 %v462, %v472
        %v483 = vmul.f32 %v463, %v472
        %v484 = vmul.f32 %v464, %v472
        %v485 = vmul.f32 %v465, %v472
        %v486 = vmul.f32 %v466, %v472
        %v487 = vld [vmem:[%s2] sm:$0x1]
        %v489 = vlaneseq
        %v490 = vshrl.u32 %v489, 7
        %v491 = vsub.s32 0, %v490
        %v492 = vrot.slane %v487, %v491
        %v494 = vadd.f32 %v474, %v492
        %v495 = vadd.f32 %v475, %v492
        %v496 = vadd.f32 %v476, %v492
        %v497 = vadd.f32 %v477, %v492
        %v498 = vadd.f32 %v478, %v492
        %v499 = vadd.f32 %v479, %v492
        %v500 = vadd.f32 %v480, %v492
        %v501 = vadd.f32 %v481, %v492
        %v502 = vadd.f32 %v482, %v492
        %v503 = vadd.f32 %v483, %v492
        %v504 = vadd.f32 %v484, %v492
        %v505 = vadd.f32 %v485, %v492
        %v506 = vadd.f32 %v486, %v492
        %v507 = vpack.c.bf16 %v495, %v494
        %v508 = vpack.c.bf16 %v497, %v496
        %v509 = vpack.c.bf16 %v499, %v498
        %v510 = vpack.c.bf16 %v501, %v500
        %v511 = vpack.c.bf16 %v503, %v502
        %v512 = vpack.c.bf16 %v505, %v504
        %v513 = vpack.c.bf16 %v506, %v506
        %v514 = vld [vmem:[#allocation5] sm:$0xf]
        %v515 = vld [vmem:[#allocation5 + $0x4] sm:$0xf]
        %v516 = vld [vmem:[#allocation5 + $0x8] sm:$0xf]
        %v517 = vld [vmem:[#allocation5 + $0xc] sm:$0xf]
        %v518 = vld [vmem:[#allocation5 + $0x10] sm:$0xf]
        %v519 = vld [vmem:[#allocation5 + $0x14] sm:$0xf]
        %v520 = vld [vmem:[#allocation5 + $0x18] sm:$0xf]
        %v521 = vld [vmem:[#allocation5 + $0x1c] sm:$0xf]
        %v522 = vld [vmem:[#allocation5 + $0x20] sm:$0xf]
        %v523 = vld [vmem:[#allocation5 + $0x24] sm:$0xf]
        %v524 = vld [vmem:[#allocation5 + $0x28] sm:$0xf]
        %v525 = vld [vmem:[#allocation5 + $0x2c] sm:$0xf]
        %v526 = vld [vmem:[#allocation5 + $0x30] sm:$0xf]
        %v527 = vld [vmem:[#allocation5 + $0x34] sm:$0xf]
        %v528 = vld [vmem:[#allocation5 + $0x38] sm:$0xf]
        %v529 = vld [vmem:[#allocation5 + $0x3c] sm:$0xf]
        %v530 = vld [vmem:[%s303] sm:$0x1]
        %v532 = vlaneseq
        %v533 = vshrl.u32 %v532, 7
        %v534 = vsub.s32 0, %v533
        %v535 = vrot.slane %v530, %v534
        %v553 = vunpack.c.l.b16 %v514
        %v554 = vunpack.c.l.b16 %v515
        %v555 = vunpack.c.l.b16 %v516
        %v556 = vunpack.c.l.b16 %v517
        %v557 = vunpack.c.l.b16 %v518
        %v558 = vunpack.c.l.b16 %v519
        %v559 = vunpack.c.l.b16 %v520
        %v560 = vunpack.c.l.b16 %v521
        %v561 = vunpack.c.l.b16 %v522
        %v562 = vunpack.c.l.b16 %v523
        %v563 = vunpack.c.l.b16 %v524
        %v564 = vunpack.c.l.b16 %v525
        %v565 = vunpack.c.l.b16 %v526
        %v566 = vunpack.c.l.b16 %v527
        %v567 = vunpack.c.l.b16 %v528
        %v568 = vunpack.c.l.b16 %v529
        %v569 = vpack.c.b16 %v554, %v553
        %v570 = vpack.c.b16 %v556, %v555
        %v571 = vpack.c.b16 %v558, %v557
        %v572 = vpack.c.b16 %v560, %v559
        %v573 = vpack.c.b16 %v562, %v561
        %v574 = vpack.c.b16 %v564, %v563
        %v575 = vpack.c.b16 %v566, %v565
        %v576 = vpack.c.b16 %v568, %v567
        %585 = vmatprep.subr.bf16.mxu0 0
        %586 = vmatpush1.bf16.msra.mxu0 %v576
        %587 = vmatprep.subr.bf16.mxu0 0
        %588 = vmatpush1.bf16.msra.mxu0 %v575
        %589 = vmatprep.subr.bf16.mxu0 0
        %590 = vmatpush1.bf16.msra.mxu0 %v574
        %591 = vmatprep.subr.bf16.mxu0 0
        %592 = vmatpush1.bf16.msra.mxu0 %v573
        %593 = vmatprep.subr.bf16.mxu0 0
        %594 = vmatpush1.bf16.msra.mxu0 %v572
        %595 = vmatprep.subr.bf16.mxu0 0
        %596 = vmatpush1.bf16.msra.mxu0 %v571
        %597 = vmatprep.subr.bf16.mxu0 0
        %598 = vmatpush1.bf16.msra.mxu0 %v570
        %599 = vmatprep.subr.bf16.mxu0 0
        %600 = vmatpush1.bf16.msra.mxu0 %v569
        %601 = vmatprep.subr.bf16.mxu0 0
        %602 = vmatpush2.bf16.msra.mxu0 0
        %603 = vmatprep.subr.bf16.mxu0 0
        %604 = vmatpush2.bf16.msra.mxu0 0
        %605 = vmatprep.subr.bf16.mxu0 0
        %606 = vmatpush2.bf16.msra.mxu0 0
        %607 = vmatprep.subr.bf16.mxu0 0
        %608 = vmatpush2.bf16.msra.mxu0 0
        %609 = vmatprep.subr.bf16.mxu0 0
        %610 = vmatpush2.bf16.msra.mxu0 0
        %611 = vmatprep.subr.bf16.mxu0 0
        %612 = vmatpush2.bf16.msra.mxu0 0
        %613 = vmatprep.subr.bf16.mxu0 0
        %614 = vmatpush2.bf16.msra.mxu0 0
        %615 = vmatprep.subr.bf16.mxu0 0
        %616 = vmatpush2.bf16.msra.mxu0 0
        %617 = vmatprep.mubr.bf16.mxu0 0
        %618 = vmatmul.mubr.bf16.gmra.mxu0 %v507
        %v619 = vpop.f32.mrf.mxu0
        %v620 = vadd.f32 %v535, %v619
        %v621 = vpop.f32.mrf.mxu0
        %v622 = vpop.f32.mrf.mxu0
        %v623 = vadd.f32 %v535, %v622
        %v624 = vpop.f32.mrf.mxu0
        %625 = vmatprep.mubr.bf16.mxu0 0
        %626 = vmatmul.mubr.bf16.gmra.mxu0 %v508
        %v627 = vpop.f32.mrf.mxu0
        %v628 = vadd.f32 %v535, %v627
        %v629 = vpop.f32.mrf.mxu0
        %v630 = vpop.f32.mrf.mxu0
        %v631 = vadd.f32 %v535, %v630
        %v632 = vpop.f32.mrf.mxu0
        %633 = vmatprep.mubr.bf16.mxu0 0
        %634 = vmatmul.mubr.bf16.gmra.mxu0 %v509
        %v635 = vpop.f32.mrf.mxu0
        %v636 = vadd.f32 %v535, %v635
        %v637 = vpop.f32.mrf.mxu0
        %v638 = vpop.f32.mrf.mxu0
        %v639 = vadd.f32 %v535, %v638
        %v640 = vpop.f32.mrf.mxu0
        %641 = vmatprep.mubr.bf16.mxu0 0
        %642 = vmatmul.mubr.bf16.gmra.mxu0 %v510
        %v643 = vpop.f32.mrf.mxu0
        %v644 = vadd.f32 %v535, %v643
        %v645 = vpop.f32.mrf.mxu0
        %v646 = vpop.f32.mrf.mxu0
        %v647 = vadd.f32 %v535, %v646
        %v648 = vpop.f32.mrf.mxu0
        %649 = vmatprep.mubr.bf16.mxu0 0
        %650 = vmatmul.mubr.bf16.gmra.mxu0 %v511
        %v651 = vpop.f32.mrf.mxu0
        %v652 = vadd.f32 %v535, %v651
        %v653 = vpop.f32.mrf.mxu0
        %v654 = vpop.f32.mrf.mxu0
        %v655 = vadd.f32 %v535, %v654
        %v656 = vpop.f32.mrf.mxu0
        %657 = vmatprep.mubr.bf16.mxu0 0
        %658 = vmatmul.mubr.bf16.gmra.mxu0 %v512
        %v659 = vpop.f32.mrf.mxu0
        %v660 = vadd.f32 %v535, %v659
        %v661 = vpop.f32.mrf.mxu0
        %v662 = vpop.f32.mrf.mxu0
        %v663 = vadd.f32 %v535, %v662
        %v664 = vpop.f32.mrf.mxu0
        %665 = vmatprep.mubr.bf16.mxu0 0
        %666 = vmatmul.mubr.bf16.gmra.mxu0 %v513
        %v667 = vpop.f32.mrf.mxu0
        %v668 = vadd.f32 %v535, %v667
        %v669 = vpop.f32.mrf.mxu0
        %v670 = vpop.f32.mrf.mxu0
        %v671 = vpop.f32.mrf.mxu0
        %672 = vdwg.mxu0
        %673 = vst [vmem:[%s295] sm:$0xff] %v620
        %674 = vst [vmem:[%s295 + $0x8] sm:$0xff] %v623
        %675 = vst [vmem:[%s295 + $0x10] sm:$0xff] %v628
        %676 = vst [vmem:[%s295 + $0x18] sm:$0xff] %v631
        %677 = vst [vmem:[%s295 + $0x20] sm:$0xff] %v636
        %678 = vst [vmem:[%s295 + $0x28] sm:$0xff] %v639
        %679 = vst [vmem:[%s295 + $0x30] sm:$0xff] %v644
        %680 = vst [vmem:[%s295 + $0x38] sm:$0xff] %v647
        %681 = vst [vmem:[%s295 + $0x40] sm:$0xff] %v652
        %682 = vst [vmem:[%s295 + $0x48] sm:$0xff] %v655
        %683 = vst [vmem:[%s295 + $0x50] sm:$0xff] %v660
        %684 = vst [vmem:[%s295 + $0x58] sm:$0xff] %v663
        %685 = vst [vmem:[%s295 + $0x60] sm:$0xff] %v668
        %s686 = sand.u32 %s165, 1
        %s687 = scalar_lea.sflag [#allocation4], %s686
        %s688 = sand.u32 %s165, 1
        %s689 = smul.addr %s688, 104
        %s690 = scalar_lea.vmem [#allocation7], %s689
        // Predicated region
        $region49: #{tpu_custom_call.1} parent=39 // pred_check
          %p691 = pneg %p175
        $region50: #{tpu_custom_call.1} parent=39 // pred_check_branch
          %693 = sbr.rel (%p691) target = $region52
        $region51: #{tpu_custom_call.1} parent=39 // pred_region
          %s694 = smul.u32 13, %s27
          %s695 = ssub.s32 25, %s694
          %p696 = scmp.lt.s32.totalorder %s695, 13
          %s697 = scalar_select %p696, %s695, 13
          %s698 = smul.u32 128, %s697
          %s700 = ssub.s32 1664, %s698
          %701 = vsyncadd %s687, %s700
          %p702 = scmp.ne.s32.totalorder 0, %s698
          %s703 = sadd.s32 %s28, %s694
          %s704 = smul.addr %s703, 128
          %s705 = scalar_lea.hbm %s5, %s704
          %s706 = smul.u32 8, %s697
          %s707 = sshll.u32 %s690, 4
          %s708 = int_to_ptr.vmem [resolvable:$true] %s707
          %s709 = sshll.u32 %s706, 4
          %713 = dma.vmem_to_hbm [thread:$0]  (%p702), %s708, %s709, %s705, %s687, 128, 128, 8
        $region52: #{tpu_custom_call.1} parent=39 // pred_fallthru
          _
      $region40: #{tpu_custom_call.1} parent=5 // pred_fallthru
        _
      %p714 = scmp.le.s32.totalorder 2, %s18
      // Predicated region
      $region53: #{tpu_custom_call.1} parent=5 // pred_check
        %p715 = pneg %p714
      $region54: #{tpu_custom_call.1} parent=5 // pred_check_branch
        %717 = sbr.rel (%p715) target = $region56
      $region55: #{tpu_custom_call.1} parent=5 // pred_region
        %s718 = ssub.s32 %s18, 2
        // Predicated region
        $region57: #{tpu_custom_call.1} parent=55 // pred_check
          %p719 = pneg %p181
        $region58: #{tpu_custom_call.1} parent=55 // pred_check_branch
          %721 = sbr.rel (%p719) target = $region60
        $region59: #{tpu_custom_call.1} parent=55 // pred_region
          %s722 = sand.u32 %s166, 1
          %s723 = scalar_lea.sflag [#allocation4], %s722
          %s724 = sand.u32 %s166, 1
          %s725 = smul.addr %s724, 104
          %s726 = scalar_lea.vmem [#allocation7], %s725
          %727 = dma.done %s723, 1664
        $region60: #{tpu_custom_call.1} parent=55 // pred_fallthru
          _
      $region56: #{tpu_custom_call.1} parent=5 // pred_fallthru
        _
    $region6: #{tpu_custom_call.1} parent=1 // loop_footer
      %s22 = sadd.s32 1, %s18
    $region7: #{tpu_custom_call.1} parent=1 // loop_footer_branch
      %17 = sbr.rel target = $region3
    $region8: #{tpu_custom_call.1} parent=1 // loop_exit
      _
    %728 = vsyncpa [#allocation3], 1
    %s729 = scalar_lea.sflag [#allocation3], 1
    %730 = vsyncpa %s729, 1
    %731 = vsyncpa [#allocation6], 1
    %732 = vsyncpa [#allocation4], 1
    %s733 = scalar_lea.sflag [#allocation4], 1
    %734 = vsyncpa %s733, 1

</llo_original>
